<compile_context>
chip_gen: v6e
topology: v6e:2x2x1
jax: 0.10.0
libtpu: 0.0.40
codegen_flags: <defaults>
</compile_context>

<pallas_src>
import jax
import jax.numpy as jnp
from jax.experimental import pallas as pl
from jax.experimental.pallas import tpu as pltpu

IN_FEATURES = 3 * 10 * 10   # 300 (10x10 input -> 6x6 conv output -> 36 linear feats)
TILE_B = 2048               # 2048 rows * 384 padded lanes * 4 B ~= 3.1 MiB / buffer:
                            # double-buffered it sits well inside the default scoped
                            # VMEM on v5e/v6e (16/32 MiB) and v7x (32 MiB).


def _round_up(n, m):
    return ((n + m - 1) // m) * m


def net_kernel(x_ref, w_ref, b_ref, o_ref):
    # x_ref: VMEM (tb, 300) f32   -- lane-dense batch tile
    # w_ref: VMEM (1, 300)  f32   -- folded conv+linear weight (broadcast row)
    # b_ref: SMEM (1,)      f32   -- folded bias
    # o_ref: VMEM (tb, 1)   f32
    prod = x_ref[...] * w_ref[...]                    # VPU broadcast multiply
    z = jnp.sum(prod, axis=-1, keepdims=True)         # XLU lane reduction -> (tb, 1)
    o_ref[...] = jnp.maximum(z + b_ref[0], 0.0)       # bias + ReLU on the VPU


def net_forward(x, conv_w, conv_b, lin_w, lin_b, *, tile_b=TILE_B):
    """x: (B, 3, 10, 10) f32. Returns (B, 1) f32 == ReLU(Linear(Flatten(Conv(x))))."""
    B = x.shape[0]
    # Lane-dense input slab: NCHW sample is contiguous (1200 B), reshape is free.
    x2 = x.reshape(B, IN_FEATURES).astype(jnp.float32)

    # ---- Fold Conv2d(3->1, 5x5) and Linear(36->1) into one (1, 300) weight ----
    cw = conv_w.reshape(3, 5, 5).astype(jnp.float32)   # out_channels=1 squeezed
    lw = lin_w.reshape(6, 6).astype(jnp.float32)       # (1, 36) -> (6, 6), row-major
    w_eff = jnp.zeros((3, 10, 10), jnp.float32)
    for i in range(6):                                  # trace-time loop (36 adds)
        for j in range(6):
            w_eff = w_eff.at[:, i:i + 5, j:j + 5].add(lw[i, j] * cw)
    w_eff = w_eff.reshape(1, IN_FEATURES)               # same (c,h,w) order as x2
    b_eff = (conv_b.astype(jnp.float32)[0] * jnp.sum(lw)
             + lin_b.astype(jnp.float32)[0]).reshape(1)

    # ---- Batch grid: sublane-aligned tile; pad B only if the tile demands it ----
    tb = min(tile_b, _round_up(B, 8))
    Bp = _round_up(B, tb)
    if Bp != B:
        # Zero-pad (safe: padded rows are dropped below). For very large,
        # non-tile-multiple batches this copy costs one extra HBM pass.
        x2 = jnp.pad(x2, ((0, Bp - B), (0, 0)))

    out = pl.pallas_call(
        net_kernel,
        out_shape=jax.ShapeDtypeStruct((Bp, 1), jnp.float32),
        grid=(Bp // tb,),
        in_specs=[
            pl.BlockSpec((tb, IN_FEATURES), lambda i: (i, 0)),       # x tile
            pl.BlockSpec((1, IN_FEATURES), lambda i: (0, 0)),        # w_eff (resident)
            pl.BlockSpec(memory_space=pltpu.MemorySpace.SMEM),       # b_eff scalar
        ],
        out_specs=pl.BlockSpec((tb, 1), lambda i: (i, 0)),
        compiler_params=pltpu.CompilerParams(
            dimension_semantics=("parallel",)),
    )(x2, w_eff, b_eff)

    return out[:B]


def _reference(x, conv_w, conv_b, lin_w, lin_b):
    # Pure-JAX reference mirroring the PyTorch module.
    y = jax.lax.conv_general_dilated(
        x, conv_w, window_strides=(1, 1), padding="VALID",
        dimension_numbers=("NCHW", "OIHW", "NCHW"))
    y = y + conv_b.reshape(1, 1, 1, 1)
    y = y.reshape(y.shape[0], -1)                 # Flatten -> (B, 36)
    y = y @ lin_w.T + lin_b                       # Linear(36, 1)
    return jnp.maximum(y, 0.0)                    # ReLU


if __name__ == "__main__":
    key = jax.random.PRNGKey(0)
    k_x, k_cw, k_cb, k_lw, k_lb, k_x2 = jax.random.split(key, 6)

    # Deterministic synthetic parameters (shapes from nn.Module __init__).
    conv_w = jax.random.normal(k_cw, (1, 3, 5, 5), dtype=jnp.float32) * 0.1
    conv_b = jax.random.normal(k_cb, (1,), dtype=jnp.float32) * 0.1
    lin_w = jax.random.normal(k_lw, (1, 36), dtype=jnp.float32) * 0.1
    lin_b = jax.random.normal(k_lb, (1,), dtype=jnp.float32) * 0.1

    # Small case (B=2): single block (padded to 8 rows internally).
    B = 2
    x = jax.random.normal(k_x, (B, 3, 10, 10), dtype=jnp.float32)
    out = jax.block_until_ready(net_forward(x, conv_w, conv_b, lin_w, lin_b))
    ref = _reference(x, conv_w, conv_b, lin_w, lin_b)
    assert out.shape == (B, 1), out.shape
    assert jnp.allclose(out, ref, atol=1e-4, rtol=1e-4), (out, ref)

    # Larger case (B=2051): exercises grid=2, batch padding, and DMA pipelining.
    B2 = 2051
    x2 = jax.random.normal(k_x2, (B2, 3, 10, 10), dtype=jnp.float32)
    out2 = jax.block_until_ready(net_forward(x2, conv_w, conv_b, lin_w, lin_b))
    ref2 = _reference(x2, conv_w, conv_b, lin_w, lin_b)
    assert out2.shape == (B2, 1), out2.shape
    assert jnp.allclose(out2, ref2, atol=1e-4, rtol=1e-4)

    print("KERNEL_OK")
</pallas_src>

<mosaic_0001>
module attributes {stable_mosaic.version = 11 : i64} {
  func.func @net_kernel(%arg0: i32, %arg1: memref<8x300xf32, #tpu.memory_space<vmem>>, %arg2: memref<1x300xf32, #tpu.memory_space<vmem>>, %arg3: memref<1xf32, #tpu.memory_space<smem>>, %arg4: memref<8x1xf32, #tpu.memory_space<vmem>>) attributes {dimension_semantics = [#tpu.dimension_semantics<parallel>], iteration_bounds = array<i64: 1>, scalar_prefetch = 0 : i64, scratch_operands = 0 : i64, tpu.core_type = #tpu.core_type<tc>, window_params = [{transform_indices = @transform_0, window_bounds = array<i64: 8, 300>}, {pipeline_mode = #tpu.pipeline_mode<synchronous>, transform_indices = @transform_1, window_bounds = array<i64: 1, 300>}, {transform_indices = @transform_2, window_bounds = array<i64: 1>}, {transform_indices = @transform_3, window_bounds = array<i64: 8, 1>}]} {
    %c0 = arith.constant 0 : index
    %c0_0 = arith.constant 0 : index
    %0 = vector.load %arg1[%c0, %c0_0] : memref<8x300xf32, #tpu.memory_space<vmem>>, vector<8x300xf32>
    %c0_1 = arith.constant 0 : index
    %c0_2 = arith.constant 0 : index
    %1 = vector.load %arg2[%c0_1, %c0_2] : memref<1x300xf32, #tpu.memory_space<vmem>>, vector<1x300xf32>
    %2 = vector.broadcast %1 : vector<1x300xf32> to vector<8x300xf32>
    %3 = arith.mulf %0, %2 : vector<8x300xf32>
    %cst = arith.constant dense<0.000000e+00> : vector<8xf32>
    %4 = vector.multi_reduction <add>, %3, %cst [1] : vector<8x300xf32> to vector<8xf32>
    %5 = vector.shape_cast %4 : vector<8xf32> to vector<8x1xf32>
    %c0_3 = arith.constant 0 : index
    %6 = memref.load %arg3[%c0_3] : memref<1xf32, #tpu.memory_space<smem>>
    %7 = vector.broadcast %6 : f32 to vector<8x1xf32>
    %8 = arith.addf %5, %7 : vector<8x1xf32>
    %cst_4 = arith.constant 0.000000e+00 : f32
    %9 = vector.broadcast %cst_4 : f32 to vector<8x1xf32>
    %10 = arith.maximumf %8, %9 : vector<8x1xf32>
    %c0_5 = arith.constant 0 : index
    %c0_6 = arith.constant 0 : index
    %11 = vector.load %arg4[%c0_5, %c0_6] : memref<8x1xf32, #tpu.memory_space<vmem>>, vector<8x1xf32>
    tpu.vector_store %arg4[%c0_5, %c0_6], %10 {strides = array<i32>} : memref<8x1xf32, #tpu.memory_space<vmem>>, vector<8x1xf32>,
    return
  }
  func.func @transform_0(%arg0: i32) -> (i32, i32) {
    %c0_i32 = arith.constant 0 : i32
    %c0_i32_0 = arith.constant 0 : i32
    return %arg0, %c0_i32 : i32, i32
  }
  func.func @transform_1(%arg0: i32) -> (i32, i32) {
    %c0_i32 = arith.constant 0 : i32
    %c0_i32_0 = arith.constant 0 : i32
    %c0_i32_1 = arith.constant 0 : i32
    return %c0_i32, %c0_i32_0 : i32, i32
  }
  func.func @transform_2(%arg0: i32) -> i32 {
    %c0_i32 = arith.constant 0 : i32
    %c0_i32_0 = arith.constant 0 : i32
    return %c0_i32 : i32
  }
  func.func @transform_3(%arg0: i32) -> (i32, i32) {
    %c0_i32 = arith.constant 0 : i32
    %c0_i32_0 = arith.constant 0 : i32
    return %arg0, %c0_i32 : i32, i32
  }
}

</mosaic_0001>

<llo_original>
// kernel: tpu_custom_call.1
$region0: #{tpu_custom_call.1}
  #allocation0 [shape = 'u32[]', space=smem, size = 0x4, offset = 0x4, fixed_abs, tag = 'smem constant byte address 0x4 - core index']
  #allocation1 [shape = 'u32[144,128]{1,0:T(1,128)}', space=vmem, size = 0x12000, scoped, tag = 'internal scratch']
  #allocation2 [shape = 'f32[1]{0:T(128)S(6)}', space=smem, size = 0x200, scoped, tag = 'scoped memory for tpu_custom_call.1']
  %s0 = inlined_call_operand.hbm [shape: f32[8,300], index: 0, kind: input, shape index: {}]
  %s1 = inlined_call_operand.vmem [shape: f32[1,300], index: 1, kind: input, shape index: {}]
  %s2 = inlined_call_operand.<no memory space> [shape: f32[1], index: 2, kind: input, shape index: {}]
  %s3 = inlined_call_operand.vmem [shape: f32[8,1], index: 3, kind: output, shape index: {}]
  %s4 = sld [smem:[#allocation0]]
  $region26: #{tpu_custom_call.1} parent=0
    _
  %s6 = ssub.s32 1, %s4
  %s7 = scalar_select 0, %s6, %s4
  %8 = sst [smem:[#allocation2]] %s2
  $region1: #{tpu_custom_call.1} parent=0
    #allocation3 [shape = 'u8[12288]{0}', space=vmem, size = 0x3000, scoped, tag = 'input window, operand 0, single buffered']
    #allocation4 [shape = 's32[1]{0}', space=sflag, size = 0x4, scoped, tag = 'scoped memory for tpu_custom_call.1']
    %9 = vsyncpa [#allocation4], 0
    // Predicated region
    $region2: #{tpu_custom_call.1} parent=1 // pred_check
      _
    $region3: #{tpu_custom_call.1} parent=1 // pred_check_branch
      %11 = sbr.rel (0) target = $region5
    $region4: #{tpu_custom_call.1} parent=1 // pred_region
      %s13 = ssub.s32 384, 384
      %14 = vsyncadd [#allocation4], %s13
      %s16 = sshll.u32 [#allocation3], 4
      %s17 = int_to_ptr.vmem [resolvable:$true] %s16
      %19 = dma.hbm_to_vmem [thread:$0]  %s0, 384, %s17, [#allocation4]
    $region5: #{tpu_custom_call.1} parent=1 // pred_fallthru
      _
    // Predicated region
    $region6: #{tpu_custom_call.1} parent=1 // pred_check
      _
    $region7: #{tpu_custom_call.1} parent=1 // pred_check_branch
      %21 = sbr.rel (0) target = $region9
    $region8: #{tpu_custom_call.1} parent=1 // pred_region
      _
    $region9: #{tpu_custom_call.1} parent=1 // pred_fallthru
      _
    // Predicated region
    $region10: #{tpu_custom_call.1} parent=1 // pred_check
      _
    $region11: #{tpu_custom_call.1} parent=1 // pred_check_branch
      %23 = sbr.rel (0) target = $region13
    $region12: #{tpu_custom_call.1} parent=1 // pred_region
      _
    $region13: #{tpu_custom_call.1} parent=1 // pred_fallthru
      _
    // Predicated region
    $region14: #{tpu_custom_call.1} parent=1 // pred_check
      _
    $region15: #{tpu_custom_call.1} parent=1 // pred_check_branch
      %25 = sbr.rel (0) target = $region17
    $region16: #{tpu_custom_call.1} parent=1 // pred_region
      %26 = dma.done [#allocation4], 384
    $region17: #{tpu_custom_call.1} parent=1 // pred_fallthru
      _
    %v27 = vld [vmem:[#allocation3] sm:$0xff]
    %v28 = vld [vmem:[#allocation3 + $0x8] sm:$0xff]
    %v29 = vld [vmem:[#allocation3 + $0x10] sm:$0xff]
    %v30 = vld [vmem:[%s1] sm:$0x7]
    %v32 = vlaneseq
    %v33 = vshrl.u32 %v32, 7
    %v34 = vsub.s32 0, %v33
    %v35 = vrot.slane %v30, %v34
    %v36 = vlaneseq
    %v37 = vshrl.u32 %v36, 7
    %v38 = vsub.s32 1, %v37
    %v39 = vrot.slane %v30, %v38
    %v40 = vlaneseq
    %v41 = vshrl.u32 %v40, 7
    %v42 = vsub.s32 2, %v41
    %v43 = vrot.slane %v30, %v42
    %v47 = vmul.f32 %v27, %v35
    %v48 = vmul.f32 %v28, %v39
    %v49 = vmul.f32 %v29, %v43
    %v50 = vadd.f32 %v47, %v48
    %vm51 = vcmask 359424
    %v52 = vsel %vm51, %v49, 0.0
    %v53 = vadd.f32 %v50, %v52
    %54 = vadd.xlane.f32.xlu0 %v53
    %v55 = vpop.xlane.xlu0 %54
    %s56 = sld [smem:[#allocation2]]
    %v57 = vstv %s56
    %v58 = vadd.f32 %v55, %v57
    %v59 = vmax.f32 %v58, 0.0
    %vm60 = vcmask 7168
    %61 = vst.msk [vmem:[%s3] sm:$0xff] %vm60, %v59
    // Predicated region
    $region18: #{tpu_custom_call.1} parent=1 // pred_check
      _
    $region19: #{tpu_custom_call.1} parent=1 // pred_check_branch
      %63 = sbr.rel (0) target = $region21
    $region20: #{tpu_custom_call.1} parent=1 // pred_region
      _
    $region21: #{tpu_custom_call.1} parent=1 // pred_fallthru
      _
    // Predicated region
    $region22: #{tpu_custom_call.1} parent=1 // pred_check
      _
    $region23: #{tpu_custom_call.1} parent=1 // pred_check_branch
      %65 = sbr.rel (0) target = $region25
    $region24: #{tpu_custom_call.1} parent=1 // pred_region
      _
    $region25: #{tpu_custom_call.1} parent=1 // pred_fallthru
      _
    %66 = vsyncpa [#allocation4], 1

</llo_original>
